<compile_context>
chip_gen: v6e
topology: v6e:2x2x1
jax: 0.10.0
libtpu: 0.0.40
codegen_flags: <defaults>
</compile_context>

<pallas_src>
import jax
import jax.numpy as jnp
from jax.experimental import pallas as pl
from jax.experimental.pallas import tpu as pltpu

_LANE = 128


def _round_up(n, m):
    return ((n + m - 1) // m) * m


def _choose_tm(B, block_m):
    """16-aligned batch tile that keeps tiles <= block_m with minimal tail waste."""
    B16 = _round_up(B, 16)
    if B16 <= block_m:
        return B16
    n_tiles = -(-B16 // block_m)                 # ceil
    return _round_up(-(-B16 // n_tiles), 16)     # balanced tile, 16-aligned


# ----------------------------- Pallas kernel --------------------------------
def _b2b_mlp_kernel(x_ref,
                    w1_ref, b1_ref,
                    w2_ref, b2_ref,
                    w3_ref, b3_ref,
                    w4_ref, b4_ref,
                    out_ref):
    """Fused [Linear -> ReLU] x3 -> Linear on one (TM, input_dim) batch tile.

    BN affines were pre-folded into the following Linear, so there is no
    per-feature scale/shift left here.  bf16 matmul inputs, f32 accumulation.
    """
    h = jnp.dot(x_ref[...].astype(jnp.bfloat16), w1_ref[...],
                preferred_element_type=jnp.float32) + b1_ref[...]
    h = jnp.maximum(h, 0.0).astype(jnp.bfloat16)

    h = jnp.dot(h, w2_ref[...],
                preferred_element_type=jnp.float32) + b2_ref[...]
    h = jnp.maximum(h, 0.0).astype(jnp.bfloat16)

    h = jnp.dot(h, w3_ref[...],
                preferred_element_type=jnp.float32) + b3_ref[...]
    h = jnp.maximum(h, 0.0).astype(jnp.bfloat16)

    out_ref[...] = jnp.dot(h, w4_ref[...],
                           preferred_element_type=jnp.float32) + b4_ref[...]


# ------------------------------- wrapper -------------------------------------
_KERNEL_PARAM_ORDER = ("w1", "b1", "w2", "b2", "w3", "b3", "w4", "b4")


def basis_to_basics_forward(x, kparams, output_dim, block_m=1024):
    """x: (B, input_dim) f32 -> (B, output_dim) f32.

    `kparams` are the folded/padded/bf16 kernel parameters from
    `prepare_kernel_params`.
    """
    B, input_dim = x.shape
    padded_out = kparams["w4"].shape[1]

    TM = _choose_tm(B, block_m)
    B_pad = _round_up(B, TM)
    if B_pad != B:
        x = jnp.pad(x, ((0, B_pad - B), (0, 0)))

    flat = [kparams[k] for k in _KERNEL_PARAM_ORDER]

    in_specs = [pl.BlockSpec((TM, input_dim), lambda i: (i, 0))]
    for arr in flat:
        # Full-array blocks; same block index every iteration -> stays resident.
        in_specs.append(pl.BlockSpec(arr.shape, lambda i: (0, 0)))
    out_spec = pl.BlockSpec((TM, padded_out), lambda i: (i, 0))

    weights = [kparams[f"w{i}"] for i in range(1, 5)]
    flops = 2 * B_pad * sum(int(w.shape[0]) * int(w.shape[1]) for w in weights)
    bytes_accessed = (
        B_pad * input_dim * 4
        + B_pad * padded_out * 4
        + sum(int(a.size) * int(jnp.dtype(a.dtype).itemsize) for a in flat)
    )

    out = pl.pallas_call(
        _b2b_mlp_kernel,
        out_shape=jax.ShapeDtypeStruct((B_pad, padded_out), jnp.float32),
        grid=(B_pad // TM,),
        in_specs=in_specs,
        out_specs=out_spec,
        compiler_params=pltpu.CompilerParams(
            dimension_semantics=("parallel",)),
        cost_estimate=pl.CostEstimate(
            flops=flops, transcendentals=0, bytes_accessed=bytes_accessed),
    )(x, *flat)

    return out[:B, :output_dim]


# ----------------------- parameter preparation (JAX glue) --------------------
def prepare_kernel_params(params, n_hidden, output_dim, lane=_LANE):
    """Fold eval-mode BN affines (s, t) into the *following* Linear, zero-pad the
    final layer to a lane-dense output width, cast weights to bf16 (biases f32)."""
    kp = {}
    kp["w1"] = params["w1"]
    kp["b1"] = params["b1"]
    for i in range(1, n_hidden + 1):
        s = params[f"s{i}"]            # (1, hidden_i)
        t = params[f"t{i}"]            # (1, hidden_i)
        w = params[f"w{i + 1}"]        # (hidden_i, next)
        b = params[f"b{i + 1}"]        # (1, next)
        kp[f"w{i + 1}"] = s.reshape(-1, 1) * w
        kp[f"b{i + 1}"] = t @ w + b

    # Lane-dense output: pad the last layer's output dim up to a multiple of 128.
    last = n_hidden + 1
    padded_out = _round_up(max(output_dim, lane), lane)
    pad = padded_out - output_dim
    if pad > 0:
        kp[f"w{last}"] = jnp.pad(kp[f"w{last}"], ((0, 0), (0, pad)))
        kp[f"b{last}"] = jnp.pad(kp[f"b{last}"], ((0, 0), (0, pad)))

    for i in range(1, last + 1):
        kp[f"w{i}"] = kp[f"w{i}"].astype(jnp.bfloat16)
        kp[f"b{i}"] = kp[f"b{i}"].astype(jnp.float32)
    return kp


# --------------------------- deterministic init -------------------------------
def init_params(key, input_dim, output_dim, hidden_dims, eps=1e-5):
    """PyTorch-like init: Linear ~ U(-1/sqrt(fan_in), 1/sqrt(fan_in)); BN
    gamma/beta/running stats drawn deterministically and pre-folded to (s, t)."""
    dims_in = [input_dim] + list(hidden_dims)
    dims_out = list(hidden_dims) + [output_dim]
    params = {}
    n_layers = len(dims_in)
    keys = jax.random.split(key, n_layers * 6)

    for i in range(n_layers):
        fan_in, fan_out = dims_in[i], dims_out[i]
        bound = 1.0 / jnp.sqrt(jnp.float32(fan_in))
        kw, kb, kg, kbe, km, kv = keys[6 * i: 6 * i + 6]
        params[f"w{i + 1}"] = jax.random.uniform(
            kw, (fan_in, fan_out), jnp.float32, -bound, bound)
        params[f"b{i + 1}"] = jax.random.uniform(
            kb, (1, fan_out), jnp.float32, -bound, bound)
        if i < len(hidden_dims):
            gamma = 1.0 + 0.1 * jax.random.normal(kg, (1, fan_out), jnp.float32)
            beta = 0.1 * jax.random.normal(kbe, (1, fan_out), jnp.float32)
            run_mean = 0.1 * jax.random.normal(km, (1, fan_out), jnp.float32)
            run_var = jax.random.uniform(kv, (1, fan_out), jnp.float32, 0.5, 1.5)
            s = gamma / jnp.sqrt(run_var + eps)
            t = beta - run_mean * s
            params[f"s{i + 1}"] = s
            params[f"t{i + 1}"] = t
    return params


# ---------------------------- pure-JAX references ------------------------------
def reference_forward(x, params, n_hidden=3):
    """Original module semantics (eval-mode BN), full f32."""
    h = x
    for i in range(n_hidden):
        h = h @ params[f"w{i + 1}"] + params[f"b{i + 1}"]
        h = jnp.maximum(h, 0.0)
        h = h * params[f"s{i + 1}"] + params[f"t{i + 1}"]
    return h @ params[f"w{n_hidden + 1}"] + params[f"b{n_hidden + 1}"]


def reference_forward_kernel_math(x, kparams, n_hidden, output_dim):
    """Exactly the kernel's math (folded BN, bf16 matmul inputs, f32 accum)."""
    h = x.astype(jnp.bfloat16)
    for i in range(1, n_hidden + 1):
        h = jnp.dot(h, kparams[f"w{i}"],
                    preferred_element_type=jnp.float32) + kparams[f"b{i}"]
        h = jnp.maximum(h, 0.0).astype(jnp.bfloat16)
    out = jnp.dot(h, kparams[f"w{n_hidden + 1}"],
                  preferred_element_type=jnp.float32) + kparams[f"b{n_hidden + 1}"]
    return out[:, :output_dim]


if __name__ == "__main__":
    input_dim = 32
    output_dim = 16
    hidden_dims = [256, 512, 256]   # module default

    key = jax.random.PRNGKey(0)
    k_x_small, k_x_big, k_p = jax.random.split(key, 3)
    params = init_params(k_p, input_dim, output_dim, hidden_dims)
    kparams = prepare_kernel_params(params, len(hidden_dims), output_dim)

    # Small batch (spec-consistent) + a multi-tile batch that exercises the grid
    # and the balanced-tile tail path (600 -> two 304-row tiles, 8 padded rows).
    for B, kx in ((8, k_x_small), (600, k_x_big)):
        x = jax.random.normal(kx, (B, input_dim), jnp.float32)

        out = basis_to_basics_forward(x, kparams, output_dim, block_m=512)
        out = jax.block_until_ready(out)
        assert out.shape == (B, output_dim)

        # Strict check: pure-JAX replica of the exact math the kernel executes.
        ref_strict = reference_forward_kernel_math(
            x, kparams, len(hidden_dims), output_dim)
        assert jnp.allclose(out, ref_strict, atol=1e-4, rtol=1e-4), \
            "mismatch vs same-math JAX reference"

        # Semantic check vs the original f32 module math; bf16-weight tolerance.
        ref = reference_forward(x, params, n_hidden=len(hidden_dims))
        assert jnp.allclose(out, ref, atol=1e-1, rtol=1e-1), \
            "mismatch vs f32 module reference beyond bf16 tolerance"

    print("KERNEL_OK")
</pallas_src>

<mosaic_0001>
module attributes {stable_mosaic.version = 11 : i64} {
  func.func @_b2b_mlp_kernel(%arg0: i32, %arg1: memref<16x32xf32, #tpu.memory_space<vmem>>, %arg2: memref<32x256xbf16, #tpu.memory_space<vmem>>, %arg3: memref<1x256xf32, #tpu.memory_space<vmem>>, %arg4: memref<256x512xbf16, #tpu.memory_space<vmem>>, %arg5: memref<1x512xf32, #tpu.memory_space<vmem>>, %arg6: memref<512x256xbf16, #tpu.memory_space<vmem>>, %arg7: memref<1x256xf32, #tpu.memory_space<vmem>>, %arg8: memref<256x128xbf16, #tpu.memory_space<vmem>>, %arg9: memref<1x128xf32, #tpu.memory_space<vmem>>, %arg10: memref<16x128xf32, #tpu.memory_space<vmem>>) attributes {dimension_semantics = [#tpu.dimension_semantics<parallel>], iteration_bounds = array<i64: 1>, scalar_prefetch = 0 : i64, scratch_operands = 0 : i64, tpu.core_type = #tpu.core_type<tc>, window_params = [{transform_indices = @transform_0, window_bounds = array<i64: 16, 32>}, {pipeline_mode = #tpu.pipeline_mode<synchronous>, transform_indices = @transform_1, window_bounds = array<i64: 32, 256>}, {pipeline_mode = #tpu.pipeline_mode<synchronous>, transform_indices = @transform_2, window_bounds = array<i64: 1, 256>}, {pipeline_mode = #tpu.pipeline_mode<synchronous>, transform_indices = @transform_3, window_bounds = array<i64: 256, 512>}, {pipeline_mode = #tpu.pipeline_mode<synchronous>, transform_indices = @transform_4, window_bounds = array<i64: 1, 512>}, {pipeline_mode = #tpu.pipeline_mode<synchronous>, transform_indices = @transform_5, window_bounds = array<i64: 512, 256>}, {pipeline_mode = #tpu.pipeline_mode<synchronous>, transform_indices = @transform_6, window_bounds = array<i64: 1, 256>}, {pipeline_mode = #tpu.pipeline_mode<synchronous>, transform_indices = @transform_7, window_bounds = array<i64: 256, 128>}, {pipeline_mode = #tpu.pipeline_mode<synchronous>, transform_indices = @transform_8, window_bounds = array<i64: 1, 128>}, {transform_indices = @transform_9, window_bounds = array<i64: 16, 128>}]} {
    %c0 = arith.constant 0 : index
    %c0_0 = arith.constant 0 : index
    %0 = vector.load %arg1[%c0, %c0_0] : memref<16x32xf32, #tpu.memory_space<vmem>>, vector<16x32xf32>
    %1 = arith.truncf %0 : vector<16x32xf32> to vector<16x32xbf16>
    %c0_1 = arith.constant 0 : index
    %c0_2 = arith.constant 0 : index
    %2 = vector.load %arg2[%c0_1, %c0_2] : memref<32x256xbf16, #tpu.memory_space<vmem>>, vector<32x256xbf16>
    %cst = arith.constant dense<0.000000e+00> : vector<16x256xf32>
    %3 = tpu.matmul %1, %2, %cst {dimension_numbers = #tpu.dot_dimension_numbers<[1], [0], [0], [1], [0, 0, 1, 1], [], []>} : vector<16x32xbf16>, vector<32x256xbf16>, vector<16x256xf32> -> vector<16x256xf32>
    %c0_3 = arith.constant 0 : index
    %c0_4 = arith.constant 0 : index
    %4 = vector.load %arg3[%c0_3, %c0_4] : memref<1x256xf32, #tpu.memory_space<vmem>>, vector<1x256xf32>
    %5 = vector.broadcast %4 : vector<1x256xf32> to vector<16x256xf32>
    %6 = arith.addf %3, %5 : vector<16x256xf32>
    %cst_5 = arith.constant 0.000000e+00 : f32
    %7 = vector.broadcast %cst_5 : f32 to vector<16x256xf32>
    %8 = arith.maximumf %6, %7 : vector<16x256xf32>
    %9 = arith.truncf %8 : vector<16x256xf32> to vector<16x256xbf16>
    %c0_6 = arith.constant 0 : index
    %c0_7 = arith.constant 0 : index
    %10 = vector.load %arg4[%c0_6, %c0_7] : memref<256x512xbf16, #tpu.memory_space<vmem>>, vector<256x512xbf16>
    %cst_8 = arith.constant dense<0.000000e+00> : vector<16x512xf32>
    %11 = tpu.matmul %9, %10, %cst_8 {dimension_numbers = #tpu.dot_dimension_numbers<[1], [0], [0], [1], [0, 0, 1, 1], [], []>} : vector<16x256xbf16>, vector<256x512xbf16>, vector<16x512xf32> -> vector<16x512xf32>
    %c0_9 = arith.constant 0 : index
    %c0_10 = arith.constant 0 : index
    %12 = vector.load %arg5[%c0_9, %c0_10] : memref<1x512xf32, #tpu.memory_space<vmem>>, vector<1x512xf32>
    %13 = vector.broadcast %12 : vector<1x512xf32> to vector<16x512xf32>
    %14 = arith.addf %11, %13 : vector<16x512xf32>
    %cst_11 = arith.constant 0.000000e+00 : f32
    %15 = vector.broadcast %cst_11 : f32 to vector<16x512xf32>
    %16 = arith.maximumf %14, %15 : vector<16x512xf32>
    %17 = arith.truncf %16 : vector<16x512xf32> to vector<16x512xbf16>
    %c0_12 = arith.constant 0 : index
    %c0_13 = arith.constant 0 : index
    %18 = vector.load %arg6[%c0_12, %c0_13] : memref<512x256xbf16, #tpu.memory_space<vmem>>, vector<512x256xbf16>
    %cst_14 = arith.constant dense<0.000000e+00> : vector<16x256xf32>
    %19 = tpu.matmul %17, %18, %cst_14 {dimension_numbers = #tpu.dot_dimension_numbers<[1], [0], [0], [1], [0, 0, 1, 1], [], []>} : vector<16x512xbf16>, vector<512x256xbf16>, vector<16x256xf32> -> vector<16x256xf32>
    %c0_15 = arith.constant 0 : index
    %c0_16 = arith.constant 0 : index
    %20 = vector.load %arg7[%c0_15, %c0_16] : memref<1x256xf32, #tpu.memory_space<vmem>>, vector<1x256xf32>
    %21 = vector.broadcast %20 : vector<1x256xf32> to vector<16x256xf32>
    %22 = arith.addf %19, %21 : vector<16x256xf32>
    %cst_17 = arith.constant 0.000000e+00 : f32
    %23 = vector.broadcast %cst_17 : f32 to vector<16x256xf32>
    %24 = arith.maximumf %22, %23 : vector<16x256xf32>
    %25 = arith.truncf %24 : vector<16x256xf32> to vector<16x256xbf16>
    %c0_18 = arith.constant 0 : index
    %c0_19 = arith.constant 0 : index
    %26 = vector.load %arg8[%c0_18, %c0_19] : memref<256x128xbf16, #tpu.memory_space<vmem>>, vector<256x128xbf16>
    %cst_20 = arith.constant dense<0.000000e+00> : vector<16x128xf32>
    %27 = tpu.matmul %25, %26, %cst_20 {dimension_numbers = #tpu.dot_dimension_numbers<[1], [0], [0], [1], [0, 0, 1, 1], [], []>} : vector<16x256xbf16>, vector<256x128xbf16>, vector<16x128xf32> -> vector<16x128xf32>
    %c0_21 = arith.constant 0 : index
    %c0_22 = arith.constant 0 : index
    %28 = vector.load %arg9[%c0_21, %c0_22] : memref<1x128xf32, #tpu.memory_space<vmem>>, vector<1x128xf32>
    %29 = vector.broadcast %28 : vector<1x128xf32> to vector<16x128xf32>
    %30 = arith.addf %27, %29 : vector<16x128xf32>
    %c0_23 = arith.constant 0 : index
    %c0_24 = arith.constant 0 : index
    %31 = vector.load %arg10[%c0_23, %c0_24] : memref<16x128xf32, #tpu.memory_space<vmem>>, vector<16x128xf32>
    tpu.vector_store %arg10[%c0_23, %c0_24], %30 {strides = array<i32>} : memref<16x128xf32, #tpu.memory_space<vmem>>, vector<16x128xf32>,
    return
  }
  func.func @transform_0(%arg0: i32) -> (i32, i32) {
    %c0_i32 = arith.constant 0 : i32
    %c0_i32_0 = arith.constant 0 : i32
    return %arg0, %c0_i32 : i32, i32
  }
  func.func @transform_1(%arg0: i32) -> (i32, i32) {
    %c0_i32 = arith.constant 0 : i32
    %c0_i32_0 = arith.constant 0 : i32
    %c0_i32_1 = arith.constant 0 : i32
    return %c0_i32, %c0_i32_0 : i32, i32
  }
  func.func @transform_2(%arg0: i32) -> (i32, i32) {
    %c0_i32 = arith.constant 0 : i32
    %c0_i32_0 = arith.constant 0 : i32
    %c0_i32_1 = arith.constant 0 : i32
    return %c0_i32, %c0_i32_0 : i32, i32
  }
  func.func @transform_3(%arg0: i32) -> (i32, i32) {
    %c0_i32 = arith.constant 0 : i32
    %c0_i32_0 = arith.constant 0 : i32
    %c0_i32_1 = arith.constant 0 : i32
    return %c0_i32, %c0_i32_0 : i32, i32
  }
  func.func @transform_4(%arg0: i32) -> (i32, i32) {
    %c0_i32 = arith.constant 0 : i32
    %c0_i32_0 = arith.constant 0 : i32
    %c0_i32_1 = arith.constant 0 : i32
    return %c0_i32, %c0_i32_0 : i32, i32
  }
  func.func @transform_5(%arg0: i32) -> (i32, i32) {
    %c0_i32 = arith.constant 0 : i32
    %c0_i32_0 = arith.constant 0 : i32
    %c0_i32_1 = arith.constant 0 : i32
    return %c0_i32, %c0_i32_0 : i32, i32
  }
  func.func @transform_6(%arg0: i32) -> (i32, i32) {
    %c0_i32 = arith.constant 0 : i32
    %c0_i32_0 = arith.constant 0 : i32
    %c0_i32_1 = arith.constant 0 : i32
    return %c0_i32, %c0_i32_0 : i32, i32
  }
  func.func @transform_7(%arg0: i32) -> (i32, i32) {
    %c0_i32 = arith.constant 0 : i32
    %c0_i32_0 = arith.constant 0 : i32
    %c0_i32_1 = arith.constant 0 : i32
    return %c0_i32, %c0_i32_0 : i32, i32
  }
  func.func @transform_8(%arg0: i32) -> (i32, i32) {
    %c0_i32 = arith.constant 0 : i32
    %c0_i32_0 = arith.constant 0 : i32
    %c0_i32_1 = arith.constant 0 : i32
    return %c0_i32, %c0_i32_0 : i32, i32
  }
  func.func @transform_9(%arg0: i32) -> (i32, i32) {
    %c0_i32 = arith.constant 0 : i32
    %c0_i32_0 = arith.constant 0 : i32
    return %arg0, %c0_i32 : i32, i32
  }
}

</mosaic_0001>

<llo_original>
// kernel: tpu_custom_call.1
$region0: #{tpu_custom_call.1}
  #allocation0 [shape = 'u32[]', space=smem, size = 0x4, offset = 0x4, fixed_abs, tag = 'smem constant byte address 0x4 - core index']
  #allocation1 [shape = 'u32[144,128]{1,0:T(1,128)}', space=vmem, size = 0x12000, scoped, tag = 'internal scratch']
  %s0 = inlined_call_operand.hbm [shape: f32[16,32], index: 0, kind: input, shape index: {}]
  %s1 = inlined_call_operand.hbm [shape: bf16[32,256], index: 1, kind: input, shape index: {}]
  %s2 = inlined_call_operand.vmem [shape: f32[1,256], index: 2, kind: input, shape index: {}]
  %s3 = inlined_call_operand.hbm [shape: bf16[256,512], index: 3, kind: input, shape index: {}]
  %s4 = inlined_call_operand.vmem [shape: f32[1,512], index: 4, kind: input, shape index: {}]
  %s5 = inlined_call_operand.hbm [shape: bf16[512,256], index: 5, kind: input, shape index: {}]
  %s6 = inlined_call_operand.vmem [shape: f32[1,256], index: 6, kind: input, shape index: {}]
  %s7 = inlined_call_operand.hbm [shape: bf16[256,128], index: 7, kind: input, shape index: {}]
  %s8 = inlined_call_operand.vmem [shape: f32[1,128], index: 8, kind: input, shape index: {}]
  %s9 = inlined_call_operand.hbm [shape: f32[16,128], index: 9, kind: output, shape index: {}]
  %s10 = sld [smem:[#allocation0]]
  $region66: #{tpu_custom_call.1} parent=0
    _
  %s12 = ssub.s32 1, %s10
  %s13 = scalar_select 0, %s12, %s10
  $region1: #{tpu_custom_call.1} parent=0
    #allocation2 [shape = 'u8[8192]{0}', space=vmem, size = 0x2000, scoped, tag = 'input window, operand 0, single buffered']
    #allocation3 [shape = 's32[1]{0}', space=sflag, size = 0x4, scoped, tag = 'scoped memory for tpu_custom_call.1']
    #allocation4 [shape = 's32[1]{0}', space=sflag, size = 0x4, scoped, tag = 'scoped memory for tpu_custom_call.1']
    #allocation5 [shape = 'u8[16384]{0}', space=vmem, size = 0x4000, scoped, tag = 'input window, operand 1, single buffered']
    #allocation6 [shape = 's32[1]{0}', space=sflag, size = 0x4, scoped, tag = 'scoped memory for tpu_custom_call.1']
    #allocation7 [shape = 'u8[262144]{0}', space=vmem, size = 0x40000, scoped, tag = 'input window, operand 3, single buffered']
    #allocation8 [shape = 'u8[262144]{0}', space=vmem, size = 0x40000, scoped, tag = 'input window, operand 5, single buffered']
    #allocation9 [shape = 's32[1]{0}', space=sflag, size = 0x4, scoped, tag = 'scoped memory for tpu_custom_call.1']
    #allocation10 [shape = 'u8[65536]{0}', space=vmem, size = 0x10000, scoped, tag = 'input window, operand 7, single buffered']
    #allocation11 [shape = 'u8[8192]{0}', space=vmem, size = 0x2000, scoped, tag = 'output window, operand 0, single buffered']
    %14 = vsyncpa [#allocation3], 0
    %15 = vsyncpa [#allocation6], 0
    %16 = vsyncpa [#allocation9], 0
    %17 = vsyncpa [#allocation4], 0
    // Predicated region
    $region2: #{tpu_custom_call.1} parent=1 // pred_check
      _
    $region3: #{tpu_custom_call.1} parent=1 // pred_check_branch
      %19 = sbr.rel (0) target = $region5
    $region4: #{tpu_custom_call.1} parent=1 // pred_region
      %s21 = ssub.s32 256, 256
      %22 = vsyncadd [#allocation3], %s21
      %s23 = sshll.u32 [#allocation2], 4
      %s24 = int_to_ptr.vmem [resolvable:$true] %s23
      %29 = dma.hbm_to_vmem [thread:$0]  %s0, 256, %s24, [#allocation3], 128, 128, 8
    $region5: #{tpu_custom_call.1} parent=1 // pred_fallthru
      _
    // Predicated region
    $region6: #{tpu_custom_call.1} parent=1 // pred_check
      _
    $region7: #{tpu_custom_call.1} parent=1 // pred_check_branch
      %31 = sbr.rel (0) target = $region9
    $region8: #{tpu_custom_call.1} parent=1 // pred_region
      %s33 = ssub.s32 512, 512
      %34 = vsyncadd [#allocation6], %s33
      %s35 = sshll.u32 [#allocation5], 4
      %s36 = int_to_ptr.vmem [resolvable:$true] %s35
      %41 = dma.hbm_to_vmem [thread:$0]  %s1, 512, %s36, [#allocation6], 128, 128, 8
    $region9: #{tpu_custom_call.1} parent=1 // pred_fallthru
      _
    // Predicated region
    $region10: #{tpu_custom_call.1} parent=1 // pred_check
      _
    $region11: #{tpu_custom_call.1} parent=1 // pred_check_branch
      %43 = sbr.rel (0) target = $region13
    $region12: #{tpu_custom_call.1} parent=1 // pred_region
      _
    $region13: #{tpu_custom_call.1} parent=1 // pred_fallthru
      _
    // Predicated region
    $region14: #{tpu_custom_call.1} parent=1 // pred_check
      _
    $region15: #{tpu_custom_call.1} parent=1 // pred_check_branch
      %45 = sbr.rel (0) target = $region17
    $region16: #{tpu_custom_call.1} parent=1 // pred_region
      %s47 = ssub.s32 8192, 8192
      %48 = vsyncadd [#allocation6], %s47
      %s49 = sshll.u32 [#allocation7], 4
      %s50 = int_to_ptr.vmem [resolvable:$true] %s49
      %55 = dma.hbm_to_vmem [thread:$0]  %s3, 8192, %s50, [#allocation6], 256, 256, 16
    $region17: #{tpu_custom_call.1} parent=1 // pred_fallthru
      _
    // Predicated region
    $region18: #{tpu_custom_call.1} parent=1 // pred_check
      _
    $region19: #{tpu_custom_call.1} parent=1 // pred_check_branch
      %57 = sbr.rel (0) target = $region21
    $region20: #{tpu_custom_call.1} parent=1 // pred_region
      _
    $region21: #{tpu_custom_call.1} parent=1 // pred_fallthru
      _
    // Predicated region
    $region22: #{tpu_custom_call.1} parent=1 // pred_check
      _
    $region23: #{tpu_custom_call.1} parent=1 // pred_check_branch
      %59 = sbr.rel (0) target = $region25
    $region24: #{tpu_custom_call.1} parent=1 // pred_region
      %s61 = ssub.s32 8192, 8192
      %62 = vsyncadd [#allocation9], %s61
      %s63 = sshll.u32 [#allocation8], 4
      %s64 = int_to_ptr.vmem [resolvable:$true] %s63
      %69 = dma.hbm_to_vmem [thread:$0]  %s5, 8192, %s64, [#allocation9], 128, 128, 8
    $region25: #{tpu_custom_call.1} parent=1 // pred_fallthru
      _
    // Predicated region
    $region26: #{tpu_custom_call.1} parent=1 // pred_check
      _
    $region27: #{tpu_custom_call.1} parent=1 // pred_check_branch
      %71 = sbr.rel (0) target = $region29
    $region28: #{tpu_custom_call.1} parent=1 // pred_region
      _
    $region29: #{tpu_custom_call.1} parent=1 // pred_fallthru
      _
    // Predicated region
    $region30: #{tpu_custom_call.1} parent=1 // pred_check
      _
    $region31: #{tpu_custom_call.1} parent=1 // pred_check_branch
      %73 = sbr.rel (0) target = $region33
    $region32: #{tpu_custom_call.1} parent=1 // pred_region
      %s75 = ssub.s32 2048, 2048
      %76 = vsyncadd [#allocation9], %s75
      %s77 = sshll.u32 [#allocation10], 4
      %s78 = int_to_ptr.vmem [resolvable:$true] %s77
      %83 = dma.hbm_to_vmem [thread:$0]  %s7, 2048, %s78, [#allocation9], 64, 64, 4
    $region33: #{tpu_custom_call.1} parent=1 // pred_fallthru
      _
    // Predicated region
    $region34: #{tpu_custom_call.1} parent=1 // pred_check
      _
    $region35: #{tpu_custom_call.1} parent=1 // pred_check_branch
      %85 = sbr.rel (0) target = $region37
    $region36: #{tpu_custom_call.1} parent=1 // pred_region
      _
    $region37: #{tpu_custom_call.1} parent=1 // pred_fallthru
      _
    // Predicated region
    $region38: #{tpu_custom_call.1} parent=1 // pred_check
      _
    $region39: #{tpu_custom_call.1} parent=1 // pred_check_branch
      %87 = sbr.rel (0) target = $region41
    $region40: #{tpu_custom_call.1} parent=1 // pred_region
      %88 = dma.done [#allocation3], 256
    $region41: #{tpu_custom_call.1} parent=1 // pred_fallthru
      _
    // Predicated region
    $region42: #{tpu_custom_call.1} parent=1 // pred_check
      _
    $region43: #{tpu_custom_call.1} parent=1 // pred_check_branch
      %90 = sbr.rel (0) target = $region45
    $region44: #{tpu_custom_call.1} parent=1 // pred_region
      %91 = dma.done [#allocation6], 512
    $region45: #{tpu_custom_call.1} parent=1 // pred_fallthru
      _
    // Predicated region
    $region46: #{tpu_custom_call.1} parent=1 // pred_check
      _
    $region47: #{tpu_custom_call.1} parent=1 // pred_check_branch
      %93 = sbr.rel (0) target = $region49
    $region48: #{tpu_custom_call.1} parent=1 // pred_region
      %94 = dma.done [#allocation6], 8192
    $region49: #{tpu_custom_call.1} parent=1 // pred_fallthru
      _
    // Predicated region
    $region50: #{tpu_custom_call.1} parent=1 // pred_check
      _
    $region51: #{tpu_custom_call.1} parent=1 // pred_check_branch
      %96 = sbr.rel (0) target = $region53
    $region52: #{tpu_custom_call.1} parent=1 // pred_region
      %97 = dma.done [#allocation9], 8192
    $region53: #{tpu_custom_call.1} parent=1 // pred_fallthru
      _
    // Predicated region
    $region54: #{tpu_custom_call.1} parent=1 // pred_check
      _
    $region55: #{tpu_custom_call.1} parent=1 // pred_check_branch
      %99 = sbr.rel (0) target = $region57
    $region56: #{tpu_custom_call.1} parent=1 // pred_region
      %100 = dma.done [#allocation9], 2048
    $region57: #{tpu_custom_call.1} parent=1 // pred_fallthru
      _
    %v102 = vld [vmem:[#allocation2] sm:$0xff]
    %v103 = vld [vmem:[#allocation2 + $0x8] sm:$0xff]
    %v104 = vpack.c.bf16 %v103, %v102
    %v105 = vld [vmem:[#allocation5] sm:$0xff]
    %v106 = vld [vmem:[#allocation5 + $0x8] sm:$0xff]
    %v107 = vld [vmem:[#allocation5 + $0x10] sm:$0xff]
    %v108 = vld [vmem:[#allocation5 + $0x18] sm:$0xff]
    %v109 = vld [vmem:[%s2] sm:$0x3]
    %v111 = vlaneseq
    %v112 = vshrl.u32 %v111, 7
    %v113 = vsub.s32 0, %v112
    %v114 = vrot.slane %v109, %v113
    %v115 = vlaneseq
    %v116 = vshrl.u32 %v115, 7
    %v117 = vsub.s32 1, %v116
    %v118 = vrot.slane %v109, %v117
    %v125 = vunpack.c.l.b16 %v105
    %v126 = vunpack.c.h.b16 %v105
    %v127 = vunpack.c.l.b16 %v106
    %v128 = vunpack.c.h.b16 %v106
    %v129 = vunpack.c.l.b16 %v107
    %v130 = vunpack.c.h.b16 %v107
    %v131 = vunpack.c.l.b16 %v108
    %v132 = vunpack.c.h.b16 %v108
    %v133 = vpack.c.b16 %v127, %v125
    %v134 = vpack.c.b16 %v128, %v126
    %v135 = vpack.c.b16 %v131, %v129
    %v136 = vpack.c.b16 %v132, %v130
    %vm141 = vcmask 261120
    %v143 = vsel %vm141, %v104, 0
    %145 = vmatprep.subr.bf16.mxu0 0
    %146 = vmatpush1.bf16.msra.mxu0 0
    %147 = vmatprep.subr.bf16.mxu0 0
    %148 = vmatpush1.bf16.msra.mxu0 0
    %149 = vmatprep.subr.bf16.mxu0 0
    %150 = vmatpush1.bf16.msra.mxu0 0
    %151 = vmatprep.subr.bf16.mxu0 0
    %152 = vmatpush1.bf16.msra.mxu0 0
    %153 = vmatprep.subr.bf16.mxu0 0
    %154 = vmatpush1.bf16.msra.mxu0 0
    %155 = vmatprep.subr.bf16.mxu0 0
    %156 = vmatpush1.bf16.msra.mxu0 0
    %157 = vmatprep.subr.bf16.mxu0 %v136
    %158 = vmatpush1.bf16.msra.mxu0 %v135
    %159 = vmatprep.subr.bf16.mxu0 %v134
    %160 = vmatpush1.bf16.msra.mxu0 %v133
    %161 = vmatprep.subr.bf16.mxu0 0
    %162 = vmatpush2.bf16.msra.mxu0 0
    %163 = vmatprep.subr.bf16.mxu0 0
    %164 = vmatpush2.bf16.msra.mxu0 0
    %165 = vmatprep.subr.bf16.mxu0 0
    %166 = vmatpush2.bf16.msra.mxu0 0
    %167 = vmatprep.subr.bf16.mxu0 0
    %168 = vmatpush2.bf16.msra.mxu0 0
    %169 = vmatprep.subr.bf16.mxu0 0
    %170 = vmatpush2.bf16.msra.mxu0 0
    %171 = vmatprep.subr.bf16.mxu0 0
    %172 = vmatpush2.bf16.msra.mxu0 0
    %173 = vmatprep.subr.bf16.mxu0 0
    %174 = vmatpush2.bf16.msra.mxu0 0
    %175 = vmatprep.subr.bf16.mxu0 0
    %176 = vmatpush2.bf16.msra.mxu0 0
    %177 = vmatprep.mubr.bf16.mxu0 0
    %178 = vmatmul.mubr.bf16.gmra.mxu0 %v143
    %v179 = vpop.f32.mrf.mxu0
    %v180 = vadd.f32 %v114, %v179
    %v181 = vpop.f32.mrf.mxu0
    %v182 = vadd.f32 %v118, %v181
    %v183 = vpop.f32.mrf.mxu0
    %v184 = vadd.f32 %v114, %v183
    %v185 = vpop.f32.mrf.mxu0
    %v186 = vadd.f32 %v118, %v185
    %187 = vdwg.mxu0
    %v188 = vmax.f32 %v180, 0.0
    %v189 = vmax.f32 %v182, 0.0
    %v190 = vmax.f32 %v184, 0.0
    %v191 = vmax.f32 %v186, 0.0
    %v192 = vpack.c.bf16 %v190, %v188
    %v193 = vpack.c.bf16 %v191, %v189
    %v194 = vld [vmem:[#allocation7] sm:$0xff]
    %v195 = vld [vmem:[#allocation7 + $0x8] sm:$0xff]
    %v196 = vld [vmem:[#allocation7 + $0x10] sm:$0xff]
    %v197 = vld [vmem:[#allocation7 + $0x18] sm:$0xff]
    %v198 = vld [vmem:[#allocation7 + $0x20] sm:$0xff]
    %v199 = vld [vmem:[#allocation7 + $0x28] sm:$0xff]
    %v200 = vld [vmem:[#allocation7 + $0x30] sm:$0xff]
    %v201 = vld [vmem:[#allocation7 + $0x38] sm:$0xff]
    %v202 = vld [vmem:[#allocation7 + $0x40] sm:$0xff]
    %v203 = vld [vmem:[#allocation7 + $0x48] sm:$0xff]
    %v204 = vld [vmem:[#allocation7 + $0x50] sm:$0xff]
    %v205 = vld [vmem:[#allocation7 + $0x58] sm:$0xff]
    %v206 = vld [vmem:[#allocation7 + $0x60] sm:$0xff]
    %v207 = vld [vmem:[#allocation7 + $0x68] sm:$0xff]
    %v208 = vld [vmem:[#allocation7 + $0x70] sm:$0xff]
    %v209 = vld [vmem:[#allocation7 + $0x78] sm:$0xff]
    %v210 = vld [vmem:[#allocation7 + $0x80] sm:$0xff]
    %v211 = vld [vmem:[#allocation7 + $0x88] sm:$0xff]
    %v212 = vld [vmem:[#allocation7 + $0x90] sm:$0xff]
    %v213 = vld [vmem:[#allocation7 + $0x98] sm:$0xff]
    %v214 = vld [vmem:[#allocation7 + $0xa0] sm:$0xff]
    %v215 = vld [vmem:[#allocation7 + $0xa8] sm:$0xff]
    %v216 = vld [vmem:[#allocation7 + $0xb0] sm:$0xff]
    %v217 = vld [vmem:[#allocation7 + $0xb8] sm:$0xff]
    %v218 = vld [vmem:[#allocation7 + $0xc0] sm:$0xff]
    %v219 = vld [vmem:[#allocation7 + $0xc8] sm:$0xff]
    %v220 = vld [vmem:[#allocation7 + $0xd0] sm:$0xff]
    %v221 = vld [vmem:[#allocation7 + $0xd8] sm:$0xff]
    %v222 = vld [vmem:[#allocation7 + $0xe0] sm:$0xff]
    %v223 = vld [vmem:[#allocation7 + $0xe8] sm:$0xff]
    %v224 = vld [vmem:[#allocation7 + $0xf0] sm:$0xff]
    %v225 = vld [vmem:[#allocation7 + $0xf8] sm:$0xff]
    %v226 = vld [vmem:[#allocation7 + $0x100] sm:$0xff]
    %v227 = vld [vmem:[#allocation7 + $0x108] sm:$0xff]
    %v228 = vld [vmem:[#allocation7 + $0x110] sm:$0xff]
    %v229 = vld [vmem:[#allocation7 + $0x118] sm:$0xff]
    %v230 = vld [vmem:[#allocation7 + $0x120] sm:$0xff]
    %v231 = vld [vmem:[#allocation7 + $0x128] sm:$0xff]
    %v232 = vld [vmem:[#allocation7 + $0x130] sm:$0xff]
    %v233 = vld [vmem:[#allocation7 + $0x138] sm:$0xff]
    %v234 = vld [vmem:[#allocation7 + $0x140] sm:$0xff]
    %v235 = vld [vmem:[#allocation7 + $0x148] sm:$0xff]
    %v236 = vld [vmem:[#allocation7 + $0x150] sm:$0xff]
    %v237 = vld [vmem:[#allocation7 + $0x158] sm:$0xff]
    %v238 = vld [vmem:[#allocation7 + $0x160] sm:$0xff]
    %v239 = vld [vmem:[#allocation7 + $0x168] sm:$0xff]
    %v240 = vld [vmem:[#allocation7 + $0x170] sm:$0xff]
    %v241 = vld [vmem:[#allocation7 + $0x178] sm:$0xff]
    %v242 = vld [vmem:[#allocation7 + $0x180] sm:$0xff]
    %v243 = vld [vmem:[#allocation7 + $0x188] sm:$0xff]
    %v244 = vld [vmem:[#allocation7 + $0x190] sm:$0xff]
    %v245 = vld [vmem:[#allocation7 + $0x198] sm:$0xff]
    %v246 = vld [vmem:[#allocation7 + $0x1a0] sm:$0xff]
    %v247 = vld [vmem:[#allocation7 + $0x1a8] sm:$0xff]
    %v248 = vld [vmem:[#allocation7 + $0x1b0] sm:$0xff]
    %v249 = vld [vmem:[#allocation7 + $0x1b8] sm:$0xff]
    %v250 = vld [vmem:[#allocation7 + $0x1c0] sm:$0xff]
    %v251 = vld [vmem:[#allocation7 + $0x1c8] sm:$0xff]
    %v252 = vld [vmem:[#allocation7 + $0x1d0] sm:$0xff]
    %v253 = vld [vmem:[#allocation7 + $0x1d8] sm:$0xff]
    %v254 = vld [vmem:[#allocation7 + $0x1e0] sm:$0xff]
    %v255 = vld [vmem:[#allocation7 + $0x1e8] sm:$0xff]
    %v256 = vld [vmem:[#allocation7 + $0x1f0] sm:$0xff]
    %v257 = vld [vmem:[#allocation7 + $0x1f8] sm:$0xff]
    %v258 = vld [vmem:[%s4] sm:$0xf]
    %v260 = vlaneseq
    %v261 = vshrl.u32 %v260, 7
    %v262 = vsub.s32 0, %v261
    %v263 = vrot.slane %v258, %v262
    %v264 = vlaneseq
    %v265 = vshrl.u32 %v264, 7
    %v266 = vsub.s32 1, %v265
    %v267 = vrot.slane %v258, %v266
    %v268 = vlaneseq
    %v269 = vshrl.u32 %v268, 7
    %v270 = vsub.s32 2, %v269
    %v271 = vrot.slane %v258, %v270
    %v272 = vlaneseq
    %v273 = vshrl.u32 %v272, 7
    %v274 = vsub.s32 3, %v273
    %v275 = vrot.slane %v258, %v274
    %v344 = vunpack.c.l.b16 %v194
    %v345 = vunpack.c.h.b16 %v194
    %v346 = vunpack.c.l.b16 %v195
    %v347 = vunpack.c.h.b16 %v195
    %v348 = vunpack.c.l.b16 %v196
    %v349 = vunpack.c.h.b16 %v196
    %v350 = vunpack.c.l.b16 %v197
    %v351 = vunpack.c.h.b16 %v197
    %v352 = vunpack.c.l.b16 %v198
    %v353 = vunpack.c.h.b16 %v198
    %v354 = vunpack.c.l.b16 %v199
    %v355 = vunpack.c.h.b16 %v199
    %v356 = vunpack.c.l.b16 %v200
    %v357 = vunpack.c.h.b16 %v200
    %v358 = vunpack.c.l.b16 %v201
    %v359 = vunpack.c.h.b16 %v201
    %v360 = vunpack.c.l.b16 %v202
    %v361 = vunpack.c.h.b16 %v202
    %v362 = vunpack.c.l.b16 %v203
    %v363 = vunpack.c.h.b16 %v203
    %v364 = vunpack.c.l.b16 %v204
    %v365 = vunpack.c.h.b16 %v204
    %v366 = vunpack.c.l.b16 %v205
    %v367 = vunpack.c.h.b16 %v205
    %v368 = vunpack.c.l.b16 %v206
    %v369 = vunpack.c.h.b16 %v206
    %v370 = vunpack.c.l.b16 %v207
    %v371 = vunpack.c.h.b16 %v207
    %v372 = vunpack.c.l.b16 %v208
    %v373 = vunpack.c.h.b16 %v208
    %v374 = vunpack.c.l.b16 %v209
    %v375 = vunpack.c.h.b16 %v209
    %v376 = vunpack.c.l.b16 %v210
    %v377 = vunpack.c.h.b16 %v210
    %v378 = vunpack.c.l.b16 %v211
    %v379 = vunpack.c.h.b16 %v211
    %v380 = vunpack.c.l.b16 %v212
    %v381 = vunpack.c.h.b16 %v212
    %v382 = vunpack.c.l.b16 %v213
    %v383 = vunpack.c.h.b16 %v213
    %v384 = vunpack.c.l.b16 %v214
    %v385 = vunpack.c.h.b16 %v214
    %v386 = vunpack.c.l.b16 %v215
    %v387 = vunpack.c.h.b16 %v215
    %v388 = vunpack.c.l.b16 %v216
    %v389 = vunpack.c.h.b16 %v216
    %v390 = vunpack.c.l.b16 %v217
    %v391 = vunpack.c.h.b16 %v217
    %v392 = vunpack.c.l.b16 %v218
    %v393 = vunpack.c.h.b16 %v218
    %v394 = vunpack.c.l.b16 %v219
    %v395 = vunpack.c.h.b16 %v219
    %v396 = vunpack.c.l.b16 %v220
    %v397 = vunpack.c.h.b16 %v220
    %v398 = vunpack.c.l.b16 %v221
    %v399 = vunpack.c.h.b16 %v221
    %v400 = vunpack.c.l.b16 %v222
    %v401 = vunpack.c.h.b16 %v222
    %v402 = vunpack.c.l.b16 %v223
    %v403 = vunpack.c.h.b16 %v223
    %v404 = vunpack.c.l.b16 %v224
    %v405 = vunpack.c.h.b16 %v224
    %v406 = vunpack.c.l.b16 %v225
    %v407 = vunpack.c.h.b16 %v225
    %v408 = vunpack.c.l.b16 %v226
    %v409 = vunpack.c.h.b16 %v226
    %v410 = vunpack.c.l.b16 %v227
    %v411 = vunpack.c.h.b16 %v227
    %v412 = vunpack.c.l.b16 %v228
    %v413 = vunpack.c.h.b16 %v228
    %v414 = vunpack.c.l.b16 %v229
    %v415 = vunpack.c.h.b16 %v229
    %v416 = vunpack.c.l.b16 %v230
    %v417 = vunpack.c.h.b16 %v230
    %v418 = vunpack.c.l.b16 %v231
    %v419 = vunpack.c.h.b16 %v231
    %v420 = vunpack.c.l.b16 %v232
    %v421 = vunpack.c.h.b16 %v232
    %v422 = vunpack.c.l.b16 %v233
    %v423 = vunpack.c.h.b16 %v233
    %v424 = vunpack.c.l.b16 %v234
    %v425 = vunpack.c.h.b16 %v234
    %v426 = vunpack.c.l.b16 %v235
    %v427 = vunpack.c.h.b16 %v235
    %v428 = vunpack.c.l.b16 %v236
    %v429 = vunpack.c.h.b16 %v236
    %v430 = vunpack.c.l.b16 %v237
    %v431 = vunpack.c.h.b16 %v237
    %v432 = vunpack.c.l.b16 %v238
    %v433 = vunpack.c.h.b16 %v238
    %v434 = vunpack.c.l.b16 %v239
    %v435 = vunpack.c.h.b16 %v239
    %v436 = vunpack.c.l.b16 %v240
    %v437 = vunpack.c.h.b16 %v240
    %v438 = vunpack.c.l.b16 %v241
    %v439 = vunpack.c.h.b16 %v241
    %v440 = vunpack.c.l.b16 %v242
    %v441 = vunpack.c.h.b16 %v242
    %v442 = vunpack.c.l.b16 %v243
    %v443 = vunpack.c.h.b16 %v243
    %v444 = vunpack.c.l.b16 %v244
    %v445 = vunpack.c.h.b16 %v244
    %v446 = vunpack.c.l.b16 %v245
    %v447 = vunpack.c.h.b16 %v245
    %v448 = vunpack.c.l.b16 %v246
    %v449 = vunpack.c.h.b16 %v246
    %v450 = vunpack.c.l.b16 %v247
    %v451 = vunpack.c.h.b16 %v247
    %v452 = vunpack.c.l.b16 %v248
    %v453 = vunpack.c.h.b16 %v248
    %v454 = vunpack.c.l.b16 %v249
    %v455 = vunpack.c.h.b16 %v249
    %v456 = vunpack.c.l.b16 %v250
    %v457 = vunpack.c.h.b16 %v250
    %v458 = vunpack.c.l.b16 %v251
    %v459 = vunpack.c.h.b16 %v251
    %v460 = vunpack.c.l.b16 %v252
    %v461 = vunpack.c.h.b16 %v252
    %v462 = vunpack.c.l.b16 %v253
    %v463 = vunpack.c.h.b16 %v253
    %v464 = vunpack.c.l.b16 %v254
    %v465 = vunpack.c.h.b16 %v254
    %v466 = vunpack.c.l.b16 %v255
    %v467 = vunpack.c.h.b16 %v255
    %v468 = vunpack.c.l.b16 %v256
    %v469 = vunpack.c.h.b16 %v256
    %v470 = vunpack.c.l.b16 %v257
    %v471 = vunpack.c.h.b16 %v257
    %v472 = vpack.c.b16 %v348, %v344
    %v473 = vpack.c.b16 %v349, %v345
    %v474 = vpack.c.b16 %v350, %v346
    %v475 = vpack.c.b16 %v351, %v347
    %v476 = vpack.c.b16 %v356, %v352
    %v477 = vpack.c.b16 %v357, %v353
    %v478 = vpack.c.b16 %v358, %v354
    %v479 = vpack.c.b16 %v359, %v355
    %v480 = vpack.c.b16 %v364, %v360
    %v481 = vpack.c.b16 %v365, %v361
    %v482 = vpack.c.b16 %v366, %v362
    %v483 = vpack.c.b16 %v367, %v363
    %v484 = vpack.c.b16 %v372, %v368
    %v485 = vpack.c.b16 %v373, %v369
    %v486 = vpack.c.b16 %v374, %v370
    %v487 = vpack.c.b16 %v375, %v371
    %v488 = vpack.c.b16 %v380, %v376
    %v489 = vpack.c.b16 %v381, %v377
    %v490 = vpack.c.b16 %v382, %v378
    %v491 = vpack.c.b16 %v383, %v379
    %v492 = vpack.c.b16 %v388, %v384
    %v493 = vpack.c.b16 %v389, %v385
    %v494 = vpack.c.b16 %v390, %v386
    %v495 = vpack.c.b16 %v391, %v387
    %v496 = vpack.c.b16 %v396, %v392
    %v497 = vpack.c.b16 %v397, %v393
    %v498 = vpack.c.b16 %v398, %v394
    %v499 = vpack.c.b16 %v399, %v395
    %v500 = vpack.c.b16 %v404, %v400
    %v501 = vpack.c.b16 %v405, %v401
    %v502 = vpack.c.b16 %v406, %v402
    %v503 = vpack.c.b16 %v407, %v403
    %v504 = vpack.c.b16 %v412, %v408
    %v505 = vpack.c.b16 %v413, %v409
    %v506 = vpack.c.b16 %v414, %v410
    %v507 = vpack.c.b16 %v415, %v411
    %v508 = vpack.c.b16 %v420, %v416
    %v509 = vpack.c.b16 %v421, %v417
    %v510 = vpack.c.b16 %v422, %v418
    %v511 = vpack.c.b16 %v423, %v419
    %v512 = vpack.c.b16 %v428, %v424
    %v513 = vpack.c.b16 %v429, %v425
    %v514 = vpack.c.b16 %v430, %v426
    %v515 = vpack.c.b16 %v431, %v427
    %v516 = vpack.c.b16 %v436, %v432
    %v517 = vpack.c.b16 %v437, %v433
    %v518 = vpack.c.b16 %v438, %v434
    %v519 = vpack.c.b16 %v439, %v435
    %v520 = vpack.c.b16 %v444, %v440
    %v521 = vpack.c.b16 %v445, %v441
    %v522 = vpack.c.b16 %v446, %v442
    %v523 = vpack.c.b16 %v447, %v443
    %v524 = vpack.c.b16 %v452, %v448
    %v525 = vpack.c.b16 %v453, %v449
    %v526 = vpack.c.b16 %v454, %v450
    %v527 = vpack.c.b16 %v455, %v451
    %v528 = vpack.c.b16 %v460, %v456
    %v529 = vpack.c.b16 %v461, %v457
    %v530 = vpack.c.b16 %v462, %v458
    %v531 = vpack.c.b16 %v463, %v459
    %v532 = vpack.c.b16 %v468, %v464
    %v533 = vpack.c.b16 %v469, %v465
    %v534 = vpack.c.b16 %v470, %v466
    %v535 = vpack.c.b16 %v471, %v467
    %600 = vmatprep.subr.bf16.mxu0 %v501
    %601 = vmatpush1.bf16.msra.mxu0 %v500
    %602 = vmatprep.subr.bf16.mxu0 %v497
    %603 = vmatpush1.bf16.msra.mxu0 %v496
    %604 = vmatprep.subr.bf16.mxu0 %v493
    %605 = vmatpush1.bf16.msra.mxu0 %v492
    %606 = vmatprep.subr.bf16.mxu0 %v489
    %607 = vmatpush1.bf16.msra.mxu0 %v488
    %608 = vmatprep.subr.bf16.mxu0 %v485
    %609 = vmatpush1.bf16.msra.mxu0 %v484
    %610 = vmatprep.subr.bf16.mxu0 %v481
    %611 = vmatpush1.bf16.msra.mxu0 %v480
    %612 = vmatprep.subr.bf16.mxu0 %v477
    %613 = vmatpush1.bf16.msra.mxu0 %v476
    %614 = vmatprep.subr.bf16.mxu0 %v473
    %615 = vmatpush1.bf16.msra.mxu0 %v472
    %616 = vmatprep.subr.bf16.mxu0 %v533
    %617 = vmatpush2.bf16.msra.mxu0 %v532
    %618 = vmatprep.subr.bf16.mxu0 %v529
    %619 = vmatpush2.bf16.msra.mxu0 %v528
    %620 = vmatprep.subr.bf16.mxu0 %v525
    %621 = vmatpush2.bf16.msra.mxu0 %v524
    %622 = vmatprep.subr.bf16.mxu0 %v521
    %623 = vmatpush2.bf16.msra.mxu0 %v520
    %624 = vmatprep.subr.bf16.mxu0 %v517
    %625 = vmatpush2.bf16.msra.mxu0 %v516
    %626 = vmatprep.subr.bf16.mxu0 %v513
    %627 = vmatpush2.bf16.msra.mxu0 %v512
    %628 = vmatprep.subr.bf16.mxu0 %v509
    %629 = vmatpush2.bf16.msra.mxu0 %v508
    %630 = vmatprep.subr.bf16.mxu0 %v505
    %631 = vmatpush2.bf16.msra.mxu0 %v504
    %632 = vmatprep.mubr.bf16.mxu0 %v193
    %633 = vmatmul.mubr.bf16.gmra.mxu0 %v192
    %v634 = vpop.f32.mrf.mxu0
    %v635 = vadd.f32 %v263, %v634
    %v636 = vpop.f32.mrf.mxu0
    %v637 = vadd.f32 %v267, %v636
    %v638 = vpop.f32.mrf.mxu0
    %v639 = vadd.f32 %v263, %v638
    %v640 = vpop.f32.mrf.mxu0
    %v641 = vadd.f32 %v267, %v640
    %642 = vdwg.mxu0
    %643 = vmatprep.subr.bf16.mxu0 %v503
    %644 = vmatpush1.bf16.msra.mxu0 %v502
    %645 = vmatprep.subr.bf16.mxu0 %v499
    %646 = vmatpush1.bf16.msra.mxu0 %v498
    %647 = vmatprep.subr.bf16.mxu0 %v495
    %648 = vmatpush1.bf16.msra.mxu0 %v494
    %649 = vmatprep.subr.bf16.mxu0 %v491
    %650 = vmatpush1.bf16.msra.mxu0 %v490
    %651 = vmatprep.subr.bf16.mxu0 %v487
    %652 = vmatpush1.bf16.msra.mxu0 %v486
    %653 = vmatprep.subr.bf16.mxu0 %v483
    %654 = vmatpush1.bf16.msra.mxu0 %v482
    %655 = vmatprep.subr.bf16.mxu0 %v479
    %656 = vmatpush1.bf16.msra.mxu0 %v478
    %657 = vmatprep.subr.bf16.mxu0 %v475
    %658 = vmatpush1.bf16.msra.mxu0 %v474
    %659 = vmatprep.subr.bf16.mxu0 %v535
    %660 = vmatpush2.bf16.msra.mxu0 %v534
    %661 = vmatprep.subr.bf16.mxu0 %v531
    %662 = vmatpush2.bf16.msra.mxu0 %v530
    %663 = vmatprep.subr.bf16.mxu0 %v527
    %664 = vmatpush2.bf16.msra.mxu0 %v526
    %665 = vmatprep.subr.bf16.mxu0 %v523
    %666 = vmatpush2.bf16.msra.mxu0 %v522
    %667 = vmatprep.subr.bf16.mxu0 %v519
    %668 = vmatpush2.bf16.msra.mxu0 %v518
    %669 = vmatprep.subr.bf16.mxu0 %v515
    %670 = vmatpush2.bf16.msra.mxu0 %v514
    %671 = vmatprep.subr.bf16.mxu0 %v511
    %672 = vmatpush2.bf16.msra.mxu0 %v510
    %673 = vmatprep.subr.bf16.mxu0 %v507
    %674 = vmatpush2.bf16.msra.mxu0 %v506
    %675 = vmatprep.mubr.bf16.mxu0 %v193
    %676 = vmatmul.mubr.bf16.gmra.mxu0 %v192
    %v677 = vpop.f32.mrf.mxu0
    %v678 = vadd.f32 %v271, %v677
    %v679 = vpop.f32.mrf.mxu0
    %v680 = vadd.f32 %v275, %v679
    %v681 = vpop.f32.mrf.mxu0
    %v682 = vadd.f32 %v271, %v681
    %v683 = vpop.f32.mrf.mxu0
    %v684 = vadd.f32 %v275, %v683
    %685 = vdwg.mxu0
    %v686 = vmax.f32 %v635, 0.0
    %v687 = vmax.f32 %v637, 0.0
    %v688 = vmax.f32 %v678, 0.0
    %v689 = vmax.f32 %v680, 0.0
    %v690 = vmax.f32 %v639, 0.0
    %v691 = vmax.f32 %v641, 0.0
    %v692 = vmax.f32 %v682, 0.0
    %v693 = vmax.f32 %v684, 0.0
    %v694 = vpack.c.bf16 %v690, %v686
    %v695 = vpack.c.bf16 %v691, %v687
    %v696 = vpack.c.bf16 %v692, %v688
    %v697 = vpack.c.bf16 %v693, %v689
    %v698 = vld [vmem:[#allocation8] sm:$0xff]
    %v699 = vld [vmem:[#allocation8 + $0x8] sm:$0xff]
    %v700 = vld [vmem:[#allocation8 + $0x10] sm:$0xff]
    %v701 = vld [vmem:[#allocation8 + $0x18] sm:$0xff]
    %v702 = vld [vmem:[#allocation8 + $0x20] sm:$0xff]
    %v703 = vld [vmem:[#allocation8 + $0x28] sm:$0xff]
    %v704 = vld [vmem:[#allocation8 + $0x30] sm:$0xff]
    %v705 = vld [vmem:[#allocation8 + $0x38] sm:$0xff]
    %v706 = vld [vmem:[#allocation8 + $0x40] sm:$0xff]
    %v707 = vld [vmem:[#allocation8 + $0x48] sm:$0xff]
    %v708 = vld [vmem:[#allocation8 + $0x50] sm:$0xff]
    %v709 = vld [vmem:[#allocation8 + $0x58] sm:$0xff]
    %v710 = vld [vmem:[#allocation8 + $0x60] sm:$0xff]
    %v711 = vld [vmem:[#allocation8 + $0x68] sm:$0xff]
    %v712 = vld [vmem:[#allocation8 + $0x70] sm:$0xff]
    %v713 = vld [vmem:[#allocation8 + $0x78] sm:$0xff]
    %v714 = vld [vmem:[#allocation8 + $0x80] sm:$0xff]
    %v715 = vld [vmem:[#allocation8 + $0x88] sm:$0xff]
    %v716 = vld [vmem:[#allocation8 + $0x90] sm:$0xff]
    %v717 = vld [vmem:[#allocation8 + $0x98] sm:$0xff]
    %v718 = vld [vmem:[#allocation8 + $0xa0] sm:$0xff]
    %v719 = vld [vmem:[#allocation8 + $0xa8] sm:$0xff]
    %v720 = vld [vmem:[#allocation8 + $0xb0] sm:$0xff]
    %v721 = vld [vmem:[#allocation8 + $0xb8] sm:$0xff]
    %v722 = vld [vmem:[#allocation8 + $0xc0] sm:$0xff]
    %v723 = vld [vmem:[#allocation8 + $0xc8] sm:$0xff]
    %v724 = vld [vmem:[#allocation8 + $0xd0] sm:$0xff]
    %v725 = vld [vmem:[#allocation8 + $0xd8] sm:$0xff]
    %v726 = vld [vmem:[#allocation8 + $0xe0] sm:$0xff]
    %v727 = vld [vmem:[#allocation8 + $0xe8] sm:$0xff]
    %v728 = vld [vmem:[#allocation8 + $0xf0] sm:$0xff]
    %v729 = vld [vmem:[#allocation8 + $0xf8] sm:$0xff]
    %v730 = vld [vmem:[#allocation8 + $0x100] sm:$0xff]
    %v731 = vld [vmem:[#allocation8 + $0x108] sm:$0xff]
    %v732 = vld [vmem:[#allocation8 + $0x110] sm:$0xff]
    %v733 = vld [vmem:[#allocation8 + $0x118] sm:$0xff]
    %v734 = vld [vmem:[#allocation8 + $0x120] sm:$0xff]
    %v735 = vld [vmem:[#allocation8 + $0x128] sm:$0xff]
    %v736 = vld [vmem:[#allocation8 + $0x130] sm:$0xff]
    %v737 = vld [vmem:[#allocation8 + $0x138] sm:$0xff]
    %v738 = vld [vmem:[#allocation8 + $0x140] sm:$0xff]
    %v739 = vld [vmem:[#allocation8 + $0x148] sm:$0xff]
    %v740 = vld [vmem:[#allocation8 + $0x150] sm:$0xff]
    %v741 = vld [vmem:[#allocation8 + $0x158] sm:$0xff]
    %v742 = vld [vmem:[#allocation8 + $0x160] sm:$0xff]
    %v743 = vld [vmem:[#allocation8 + $0x168] sm:$0xff]
    %v744 = vld [vmem:[#allocation8 + $0x170] sm:$0xff]
    %v745 = vld [vmem:[#allocation8 + $0x178] sm:$0xff]
    %v746 = vld [vmem:[#allocation8 + $0x180] sm:$0xff]
    %v747 = vld [vmem:[#allocation8 + $0x188] sm:$0xff]
    %v748 = vld [vmem:[#allocation8 + $0x190] sm:$0xff]
    %v749 = vld [vmem:[#allocation8 + $0x198] sm:$0xff]
    %v750 = vld [vmem:[#allocation8 + $0x1a0] sm:$0xff]
    %v751 = vld [vmem:[#allocation8 + $0x1a8] sm:$0xff]
    %v752 = vld [vmem:[#allocation8 + $0x1b0] sm:$0xff]
    %v753 = vld [vmem:[#allocation8 + $0x1b8] sm:$0xff]
    %v754 = vld [vmem:[#allocation8 + $0x1c0] sm:$0xff]
    %v755 = vld [vmem:[#allocation8 + $0x1c8] sm:$0xff]
    %v756 = vld [vmem:[#allocation8 + $0x1d0] sm:$0xff]
    %v757 = vld [vmem:[#allocation8 + $0x1d8] sm:$0xff]
    %v758 = vld [vmem:[#allocation8 + $0x1e0] sm:$0xff]
    %v759 = vld [vmem:[#allocation8 + $0x1e8] sm:$0xff]
    %v760 = vld [vmem:[#allocation8 + $0x1f0] sm:$0xff]
    %v761 = vld [vmem:[#allocation8 + $0x1f8] sm:$0xff]
    %v762 = vld [vmem:[%s6] sm:$0x3]
    %v764 = vlaneseq
    %v765 = vshrl.u32 %v764, 7
    %v766 = vsub.s32 0, %v765
    %v767 = vrot.slane %v762, %v766
    %v768 = vlaneseq
    %v769 = vshrl.u32 %v768, 7
    %v770 = vsub.s32 1, %v769
    %v771 = vrot.slane %v762, %v770
    %v838 = vunpack.c.l.b16 %v698
    %v839 = vunpack.c.h.b16 %v698
    %v840 = vunpack.c.l.b16 %v699
    %v841 = vunpack.c.h.b16 %v699
    %v842 = vunpack.c.l.b16 %v700
    %v843 = vunpack.c.h.b16 %v700
    %v844 = vunpack.c.l.b16 %v701
    %v845 = vunpack.c.h.b16 %v701
    %v846 = vunpack.c.l.b16 %v702
    %v847 = vunpack.c.h.b16 %v702
    %v848 = vunpack.c.l.b16 %v703
    %v849 = vunpack.c.h.b16 %v703
    %v850 = vunpack.c.l.b16 %v704
    %v851 = vunpack.c.h.b16 %v704
    %v852 = vunpack.c.l.b16 %v705
    %v853 = vunpack.c.h.b16 %v705
    %v854 = vunpack.c.l.b16 %v706
    %v855 = vunpack.c.h.b16 %v706
    %v856 = vunpack.c.l.b16 %v707
    %v857 = vunpack.c.h.b16 %v707
    %v858 = vunpack.c.l.b16 %v708
    %v859 = vunpack.c.h.b16 %v708
    %v860 = vunpack.c.l.b16 %v709
    %v861 = vunpack.c.h.b16 %v709
    %v862 = vunpack.c.l.b16 %v710
    %v863 = vunpack.c.h.b16 %v710
    %v864 = vunpack.c.l.b16 %v711
    %v865 = vunpack.c.h.b16 %v711
    %v866 = vunpack.c.l.b16 %v712
    %v867 = vunpack.c.h.b16 %v712
    %v868 = vunpack.c.l.b16 %v713
    %v869 = vunpack.c.h.b16 %v713
    %v870 = vunpack.c.l.b16 %v714
    %v871 = vunpack.c.h.b16 %v714
    %v872 = vunpack.c.l.b16 %v715
    %v873 = vunpack.c.h.b16 %v715
    %v874 = vunpack.c.l.b16 %v716
    %v875 = vunpack.c.h.b16 %v716
    %v876 = vunpack.c.l.b16 %v717
    %v877 = vunpack.c.h.b16 %v717
    %v878 = vunpack.c.l.b16 %v718
    %v879 = vunpack.c.h.b16 %v718
    %v880 = vunpack.c.l.b16 %v719
    %v881 = vunpack.c.h.b16 %v719
    %v882 = vunpack.c.l.b16 %v720
    %v883 = vunpack.c.h.b16 %v720
    %v884 = vunpack.c.l.b16 %v721
    %v885 = vunpack.c.h.b16 %v721
    %v886 = vunpack.c.l.b16 %v722
    %v887 = vunpack.c.h.b16 %v722
    %v888 = vunpack.c.l.b16 %v723
    %v889 = vunpack.c.h.b16 %v723
    %v890 = vunpack.c.l.b16 %v724
    %v891 = vunpack.c.h.b16 %v724
    %v892 = vunpack.c.l.b16 %v725
    %v893 = vunpack.c.h.b16 %v725
    %v894 = vunpack.c.l.b16 %v726
    %v895 = vunpack.c.h.b16 %v726
    %v896 = vunpack.c.l.b16 %v727
    %v897 = vunpack.c.h.b16 %v727
    %v898 = vunpack.c.l.b16 %v728
    %v899 = vunpack.c.h.b16 %v728
    %v900 = vunpack.c.l.b16 %v729
    %v901 = vunpack.c.h.b16 %v729
    %v902 = vunpack.c.l.b16 %v730
    %v903 = vunpack.c.h.b16 %v730
    %v904 = vunpack.c.l.b16 %v731
    %v905 = vunpack.c.h.b16 %v731
    %v906 = vunpack.c.l.b16 %v732
    %v907 = vunpack.c.h.b16 %v732
    %v908 = vunpack.c.l.b16 %v733
    %v909 = vunpack.c.h.b16 %v733
    %v910 = vunpack.c.l.b16 %v734
    %v911 = vunpack.c.h.b16 %v734
    %v912 = vunpack.c.l.b16 %v735
    %v913 = vunpack.c.h.b16 %v735
    %v914 = vunpack.c.l.b16 %v736
    %v915 = vunpack.c.h.b16 %v736
    %v916 = vunpack.c.l.b16 %v737
    %v917 = vunpack.c.h.b16 %v737
    %v918 = vunpack.c.l.b16 %v738
    %v919 = vunpack.c.h.b16 %v738
    %v920 = vunpack.c.l.b16 %v739
    %v921 = vunpack.c.h.b16 %v739
    %v922 = vunpack.c.l.b16 %v740
    %v923 = vunpack.c.h.b16 %v740
    %v924 = vunpack.c.l.b16 %v741
    %v925 = vunpack.c.h.b16 %v741
    %v926 = vunpack.c.l.b16 %v742
    %v927 = vunpack.c.h.b16 %v742
    %v928 = vunpack.c.l.b16 %v743
    %v929 = vunpack.c.h.b16 %v743
    %v930 = vunpack.c.l.b16 %v744
    %v931 = vunpack.c.h.b16 %v744
    %v932 = vunpack.c.l.b16 %v745
    %v933 = vunpack.c.h.b16 %v745
    %v934 = vunpack.c.l.b16 %v746
    %v935 = vunpack.c.h.b16 %v746
    %v936 = vunpack.c.l.b16 %v747
    %v937 = vunpack.c.h.b16 %v747
    %v938 = vunpack.c.l.b16 %v748
    %v939 = vunpack.c.h.b16 %v748
    %v940 = vunpack.c.l.b16 %v749
    %v941 = vunpack.c.h.b16 %v749
    %v942 = vunpack.c.l.b16 %v750
    %v943 = vunpack.c.h.b16 %v750
    %v944 = vunpack.c.l.b16 %v751
    %v945 = vunpack.c.h.b16 %v751
    %v946 = vunpack.c.l.b16 %v752
    %v947 = vunpack.c.h.b16 %v752
    %v948 = vunpack.c.l.b16 %v753
    %v949 = vunpack.c.h.b16 %v753
    %v950 = vunpack.c.l.b16 %v754
    %v951 = vunpack.c.h.b16 %v754
    %v952 = vunpack.c.l.b16 %v755
    %v953 = vunpack.c.h.b16 %v755
    %v954 = vunpack.c.l.b16 %v756
    %v955 = vunpack.c.h.b16 %v756
    %v956 = vunpack.c.l.b16 %v757
    %v957 = vunpack.c.h.b16 %v757
    %v958 = vunpack.c.l.b16 %v758
    %v959 = vunpack.c.h.b16 %v758
    %v960 = vunpack.c.l.b16 %v759
    %v961 = vunpack.c.h.b16 %v759
    %v962 = vunpack.c.l.b16 %v760
    %v963 = vunpack.c.h.b16 %v760
    %v964 = vunpack.c.l.b16 %v761
    %v965 = vunpack.c.h.b16 %v761
    %v966 = vpack.c.b16 %v840, %v838
    %v967 = vpack.c.b16 %v841, %v839
    %v968 = vpack.c.b16 %v844, %v842
    %v969 = vpack.c.b16 %v845, %v843
    %v970 = vpack.c.b16 %v848, %v846
    %v971 = vpack.c.b16 %v849, %v847
    %v972 = vpack.c.b16 %v852, %v850
    %v973 = vpack.c.b16 %v853, %v851
    %v974 = vpack.c.b16 %v856, %v854
    %v975 = vpack.c.b16 %v857, %v855
    %v976 = vpack.c.b16 %v860, %v858
    %v977 = vpack.c.b16 %v861, %v859
    %v978 = vpack.c.b16 %v864, %v862
    %v979 = vpack.c.b16 %v865, %v863
    %v980 = vpack.c.b16 %v868, %v866
    %v981 = vpack.c.b16 %v869, %v867
    %v982 = vpack.c.b16 %v872, %v870
    %v983 = vpack.c.b16 %v873, %v871
    %v984 = vpack.c.b16 %v876, %v874
    %v985 = vpack.c.b16 %v877, %v875
    %v986 = vpack.c.b16 %v880, %v878
    %v987 = vpack.c.b16 %v881, %v879
    %v988 = vpack.c.b16 %v884, %v882
    %v989 = vpack.c.b16 %v885, %v883
    %v990 = vpack.c.b16 %v888, %v886
    %v991 = vpack.c.b16 %v889, %v887
    %v992 = vpack.c.b16 %v892, %v890
    %v993 = vpack.c.b16 %v893, %v891
    %v994 = vpack.c.b16 %v896, %v894
    %v995 = vpack.c.b16 %v897, %v895
    %v996 = vpack.c.b16 %v900, %v898
    %v997 = vpack.c.b16 %v901, %v899
    %v998 = vpack.c.b16 %v904, %v902
    %v999 = vpack.c.b16 %v905, %v903
    %v1000 = vpack.c.b16 %v908, %v906
    %v1001 = vpack.c.b16 %v909, %v907
    %v1002 = vpack.c.b16 %v912, %v910
    %v1003 = vpack.c.b16 %v913, %v911
    %v1004 = vpack.c.b16 %v916, %v914
    %v1005 = vpack.c.b16 %v917, %v915
    %v1006 = vpack.c.b16 %v920, %v918
    %v1007 = vpack.c.b16 %v921, %v919
    %v1008 = vpack.c.b16 %v924, %v922
    %v1009 = vpack.c.b16 %v925, %v923
    %v1010 = vpack.c.b16 %v928, %v926
    %v1011 = vpack.c.b16 %v929, %v927
    %v1012 = vpack.c.b16 %v932, %v930
    %v1013 = vpack.c.b16 %v933, %v931
    %v1014 = vpack.c.b16 %v936, %v934
    %v1015 = vpack.c.b16 %v937, %v935
    %v1016 = vpack.c.b16 %v940, %v938
    %v1017 = vpack.c.b16 %v941, %v939
    %v1018 = vpack.c.b16 %v944, %v942
    %v1019 = vpack.c.b16 %v945, %v943
    %v1020 = vpack.c.b16 %v948, %v946
    %v1021 = vpack.c.b16 %v949, %v947
    %v1022 = vpack.c.b16 %v952, %v950
    %v1023 = vpack.c.b16 %v953, %v951
    %v1024 = vpack.c.b16 %v956, %v954
    %v1025 = vpack.c.b16 %v957, %v955
    %v1026 = vpack.c.b16 %v960, %v958
    %v1027 = vpack.c.b16 %v961, %v959
    %v1028 = vpack.c.b16 %v964, %v962
    %v1029 = vpack.c.b16 %v965, %v963
    %1094 = vmatprep.subr.bf16.mxu0 %v981
    %1095 = vmatpush1.bf16.msra.mxu0 %v980
    %1096 = vmatprep.subr.bf16.mxu0 %v979
    %1097 = vmatpush1.bf16.msra.mxu0 %v978
    %1098 = vmatprep.subr.bf16.mxu0 %v977
    %1099 = vmatpush1.bf16.msra.mxu0 %v976
    %1100 = vmatprep.subr.bf16.mxu0 %v975
    %1101 = vmatpush1.bf16.msra.mxu0 %v974
    %1102 = vmatprep.subr.bf16.mxu0 %v973
    %1103 = vmatpush1.bf16.msra.mxu0 %v972
    %1104 = vmatprep.subr.bf16.mxu0 %v971
    %1105 = vmatpush1.bf16.msra.mxu0 %v970
    %1106 = vmatprep.subr.bf16.mxu0 %v969
    %1107 = vmatpush1.bf16.msra.mxu0 %v968
    %1108 = vmatprep.subr.bf16.mxu0 %v967
    %1109 = vmatpush1.bf16.msra.mxu0 %v966
    %1110 = vmatprep.subr.bf16.mxu0 %v997
    %1111 = vmatpush2.bf16.msra.mxu0 %v996
    %1112 = vmatprep.subr.bf16.mxu0 %v995
    %1113 = vmatpush2.bf16.msra.mxu0 %v994
    %1114 = vmatprep.subr.bf16.mxu0 %v993
    %1115 = vmatpush2.bf16.msra.mxu0 %v992
    %1116 = vmatprep.subr.bf16.mxu0 %v991
    %1117 = vmatpush2.bf16.msra.mxu0 %v990
    %1118 = vmatprep.subr.bf16.mxu0 %v989
    %1119 = vmatpush2.bf16.msra.mxu0 %v988
    %1120 = vmatprep.subr.bf16.mxu0 %v987
    %1121 = vmatpush2.bf16.msra.mxu0 %v986
    %1122 = vmatprep.subr.bf16.mxu0 %v985
    %1123 = vmatpush2.bf16.msra.mxu0 %v984
    %1124 = vmatprep.subr.bf16.mxu0 %v983
    %1125 = vmatpush2.bf16.msra.mxu0 %v982
    %1126 = vmatprep.mubr.bf16.mxu0 %v695
    %1127 = vmatmul.mubr.bf16.gmra.mxu0 %v694
    %v1128 = vpop.f32.mrf.mxu0
    %v1129 = vadd.f32 %v767, %v1128
    %v1130 = vpop.f32.mrf.mxu0
    %v1131 = vadd.f32 %v771, %v1130
    %v1132 = vpop.f32.mrf.mxu0
    %v1133 = vadd.f32 %v767, %v1132
    %v1134 = vpop.f32.mrf.mxu0
    %v1135 = vadd.f32 %v771, %v1134
    %1136 = vdwg.mxu0
    %1137 = vmatprep.subr.bf16.mxu0 %v1013
    %1138 = vmatpush1.bf16.msra.mxu0 %v1012
    %1139 = vmatprep.subr.bf16.mxu0 %v1011
    %1140 = vmatpush1.bf16.msra.mxu0 %v1010
    %1141 = vmatprep.subr.bf16.mxu0 %v1009
    %1142 = vmatpush1.bf16.msra.mxu0 %v1008
    %1143 = vmatprep.subr.bf16.mxu0 %v1007
    %1144 = vmatpush1.bf16.msra.mxu0 %v1006
    %1145 = vmatprep.subr.bf16.mxu0 %v1005
    %1146 = vmatpush1.bf16.msra.mxu0 %v1004
    %1147 = vmatprep.subr.bf16.mxu0 %v1003
    %1148 = vmatpush1.bf16.msra.mxu0 %v1002
    %1149 = vmatprep.subr.bf16.mxu0 %v1001
    %1150 = vmatpush1.bf16.msra.mxu0 %v1000
    %1151 = vmatprep.subr.bf16.mxu0 %v999
    %1152 = vmatpush1.bf16.msra.mxu0 %v998
    %1153 = vmatprep.subr.bf16.mxu0 %v1029
    %1154 = vmatpush2.bf16.msra.mxu0 %v1028
    %1155 = vmatprep.subr.bf16.mxu0 %v1027
    %1156 = vmatpush2.bf16.msra.mxu0 %v1026
    %1157 = vmatprep.subr.bf16.mxu0 %v1025
    %1158 = vmatpush2.bf16.msra.mxu0 %v1024
    %1159 = vmatprep.subr.bf16.mxu0 %v1023
    %1160 = vmatpush2.bf16.msra.mxu0 %v1022
    %1161 = vmatprep.subr.bf16.mxu0 %v1021
    %1162 = vmatpush2.bf16.msra.mxu0 %v1020
    %1163 = vmatprep.subr.bf16.mxu0 %v1019
    %1164 = vmatpush2.bf16.msra.mxu0 %v1018
    %1165 = vmatprep.subr.bf16.mxu0 %v1017
    %1166 = vmatpush2.bf16.msra.mxu0 %v1016
    %1167 = vmatprep.subr.bf16.mxu0 %v1015
    %1168 = vmatpush2.bf16.msra.mxu0 %v1014
    %1169 = vmatprep.mubr.bf16.mxu0 %v697
    %1170 = vmatmul.mubr.bf16.gmra.mxu0 %v696
    %v1171 = vpop.f32.mrf.mxu0
    %v1172 = vadd.f32 %v1129, %v1171
    %v1173 = vpop.f32.mrf.mxu0
    %v1174 = vadd.f32 %v1131, %v1173
    %v1175 = vpop.f32.mrf.mxu0
    %v1176 = vadd.f32 %v1133, %v1175
    %v1177 = vpop.f32.mrf.mxu0
    %v1178 = vadd.f32 %v1135, %v1177
    %1179 = vdwg.mxu0
    %v1180 = vmax.f32 %v1172, 0.0
    %v1181 = vmax.f32 %v1174, 0.0
    %v1182 = vmax.f32 %v1176, 0.0
    %v1183 = vmax.f32 %v1178, 0.0
    %v1184 = vpack.c.bf16 %v1182, %v1180
    %v1185 = vpack.c.bf16 %v1183, %v1181
    %v1186 = vld [vmem:[#allocation10] sm:$0xf]
    %v1187 = vld [vmem:[#allocation10 + $0x4] sm:$0xf]
    %v1188 = vld [vmem:[#allocation10 + $0x8] sm:$0xf]
    %v1189 = vld [vmem:[#allocation10 + $0xc] sm:$0xf]
    %v1190 = vld [vmem:[#allocation10 + $0x10] sm:$0xf]
    %v1191 = vld [vmem:[#allocation10 + $0x14] sm:$0xf]
    %v1192 = vld [vmem:[#allocation10 + $0x18] sm:$0xf]
    %v1193 = vld [vmem:[#allocation10 + $0x1c] sm:$0xf]
    %v1194 = vld [vmem:[#allocation10 + $0x20] sm:$0xf]
    %v1195 = vld [vmem:[#allocation10 + $0x24] sm:$0xf]
    %v1196 = vld [vmem:[#allocation10 + $0x28] sm:$0xf]
    %v1197 = vld [vmem:[#allocation10 + $0x2c] sm:$0xf]
    %v1198 = vld [vmem:[#allocation10 + $0x30] sm:$0xf]
    %v1199 = vld [vmem:[#allocation10 + $0x34] sm:$0xf]
    %v1200 = vld [vmem:[#allocation10 + $0x38] sm:$0xf]
    %v1201 = vld [vmem:[#allocation10 + $0x3c] sm:$0xf]
    %v1202 = vld [vmem:[#allocation10 + $0x40] sm:$0xf]
    %v1203 = vld [vmem:[#allocation10 + $0x44] sm:$0xf]
    %v1204 = vld [vmem:[#allocation10 + $0x48] sm:$0xf]
    %v1205 = vld [vmem:[#allocation10 + $0x4c] sm:$0xf]
    %v1206 = vld [vmem:[#allocation10 + $0x50] sm:$0xf]
    %v1207 = vld [vmem:[#allocation10 + $0x54] sm:$0xf]
    %v1208 = vld [vmem:[#allocation10 + $0x58] sm:$0xf]
    %v1209 = vld [vmem:[#allocation10 + $0x5c] sm:$0xf]
    %v1210 = vld [vmem:[#allocation10 + $0x60] sm:$0xf]
    %v1211 = vld [vmem:[#allocation10 + $0x64] sm:$0xf]
    %v1212 = vld [vmem:[#allocation10 + $0x68] sm:$0xf]
    %v1213 = vld [vmem:[#allocation10 + $0x6c] sm:$0xf]
    %v1214 = vld [vmem:[#allocation10 + $0x70] sm:$0xf]
    %v1215 = vld [vmem:[#allocation10 + $0x74] sm:$0xf]
    %v1216 = vld [vmem:[#allocation10 + $0x78] sm:$0xf]
    %v1217 = vld [vmem:[#allocation10 + $0x7c] sm:$0xf]
    %v1218 = vld [vmem:[%s8] sm:$0x1]
    %v1220 = vlaneseq
    %v1221 = vshrl.u32 %v1220, 7
    %v1222 = vsub.s32 0, %v1221
    %v1223 = vrot.slane %v1218, %v1222
    %v1257 = vunpack.c.l.b16 %v1186
    %v1258 = vunpack.c.l.b16 %v1187
    %v1259 = vunpack.c.l.b16 %v1188
    %v1260 = vunpack.c.l.b16 %v1189
    %v1261 = vunpack.c.l.b16 %v1190
    %v1262 = vunpack.c.l.b16 %v1191
    %v1263 = vunpack.c.l.b16 %v1192
    %v1264 = vunpack.c.l.b16 %v1193
    %v1265 = vunpack.c.l.b16 %v1194
    %v1266 = vunpack.c.l.b16 %v1195
    %v1267 = vunpack.c.l.b16 %v1196
    %v1268 = vunpack.c.l.b16 %v1197
    %v1269 = vunpack.c.l.b16 %v1198
    %v1270 = vunpack.c.l.b16 %v1199
    %v1271 = vunpack.c.l.b16 %v1200
    %v1272 = vunpack.c.l.b16 %v1201
    %v1273 = vunpack.c.l.b16 %v1202
    %v1274 = vunpack.c.l.b16 %v1203
    %v1275 = vunpack.c.l.b16 %v1204
    %v1276 = vunpack.c.l.b16 %v1205
    %v1277 = vunpack.c.l.b16 %v1206
    %v1278 = vunpack.c.l.b16 %v1207
    %v1279 = vunpack.c.l.b16 %v1208
    %v1280 = vunpack.c.l.b16 %v1209
    %v1281 = vunpack.c.l.b16 %v1210
    %v1282 = vunpack.c.l.b16 %v1211
    %v1283 = vunpack.c.l.b16 %v1212
    %v1284 = vunpack.c.l.b16 %v1213
    %v1285 = vunpack.c.l.b16 %v1214
    %v1286 = vunpack.c.l.b16 %v1215
    %v1287 = vunpack.c.l.b16 %v1216
    %v1288 = vunpack.c.l.b16 %v1217
    %v1289 = vpack.c.b16 %v1258, %v1257
    %v1290 = vpack.c.b16 %v1260, %v1259
    %v1291 = vpack.c.b16 %v1262, %v1261
    %v1292 = vpack.c.b16 %v1264, %v1263
    %v1293 = vpack.c.b16 %v1266, %v1265
    %v1294 = vpack.c.b16 %v1268, %v1267
    %v1295 = vpack.c.b16 %v1270, %v1269
    %v1296 = vpack.c.b16 %v1272, %v1271
    %v1297 = vpack.c.b16 %v1274, %v1273
    %v1298 = vpack.c.b16 %v1276, %v1275
    %v1299 = vpack.c.b16 %v1278, %v1277
    %v1300 = vpack.c.b16 %v1280, %v1279
    %v1301 = vpack.c.b16 %v1282, %v1281
    %v1302 = vpack.c.b16 %v1284, %v1283
    %v1303 = vpack.c.b16 %v1286, %v1285
    %v1304 = vpack.c.b16 %v1288, %v1287
    %1321 = vmatprep.subr.bf16.mxu0 0
    %1322 = vmatpush1.bf16.msra.mxu0 %v1296
    %1323 = vmatprep.subr.bf16.mxu0 0
    %1324 = vmatpush1.bf16.msra.mxu0 %v1295
    %1325 = vmatprep.subr.bf16.mxu0 0
    %1326 = vmatpush1.bf16.msra.mxu0 %v1294
    %1327 = vmatprep.subr.bf16.mxu0 0
    %1328 = vmatpush1.bf16.msra.mxu0 %v1293
    %1329 = vmatprep.subr.bf16.mxu0 0
    %1330 = vmatpush1.bf16.msra.mxu0 %v1292
    %1331 = vmatprep.subr.bf16.mxu0 0
    %1332 = vmatpush1.bf16.msra.mxu0 %v1291
    %1333 = vmatprep.subr.bf16.mxu0 0
    %1334 = vmatpush1.bf16.msra.mxu0 %v1290
    %1335 = vmatprep.subr.bf16.mxu0 0
    %1336 = vmatpush1.bf16.msra.mxu0 %v1289
    %1337 = vmatprep.subr.bf16.mxu0 0
    %1338 = vmatpush2.bf16.msra.mxu0 %v1304
    %1339 = vmatprep.subr.bf16.mxu0 0
    %1340 = vmatpush2.bf16.msra.mxu0 %v1303
    %1341 = vmatprep.subr.bf16.mxu0 0
    %1342 = vmatpush2.bf16.msra.mxu0 %v1302
    %1343 = vmatprep.subr.bf16.mxu0 0
    %1344 = vmatpush2.bf16.msra.mxu0 %v1301
    %1345 = vmatprep.subr.bf16.mxu0 0
    %1346 = vmatpush2.bf16.msra.mxu0 %v1300
    %1347 = vmatprep.subr.bf16.mxu0 0
    %1348 = vmatpush2.bf16.msra.mxu0 %v1299
    %1349 = vmatprep.subr.bf16.mxu0 0
    %1350 = vmatpush2.bf16.msra.mxu0 %v1298
    %1351 = vmatprep.subr.bf16.mxu0 0
    %1352 = vmatpush2.bf16.msra.mxu0 %v1297
    %1353 = vmatprep.mubr.bf16.mxu0 %v1185
    %1354 = vmatmul.mubr.bf16.gmra.mxu0 %v1184
    %v1355 = vpop.f32.mrf.mxu0
    %v1356 = vadd.f32 %v1223, %v1355
    %v1357 = vpop.f32.mrf.mxu0
    %v1358 = vpop.f32.mrf.mxu0
    %v1359 = vadd.f32 %v1223, %v1358
    %v1360 = vpop.f32.mrf.mxu0
    %1361 = vdwg.mxu0
    %1362 = vst [vmem:[#allocation11] sm:$0xff] %v1356
    %1363 = vst [vmem:[#allocation11 + $0x8] sm:$0xff] %v1359
    // Predicated region
    $region58: #{tpu_custom_call.1} parent=1 // pred_check
      _
    $region59: #{tpu_custom_call.1} parent=1 // pred_check_branch
      %1365 = sbr.rel (0) target = $region61
    $region60: #{tpu_custom_call.1} parent=1 // pred_region
      %s1367 = ssub.s32 256, 256
      %1368 = vsyncadd [#allocation4], %s1367
      %s1369 = sshll.u32 [#allocation11], 4
      %s1370 = int_to_ptr.vmem [resolvable:$true] %s1369
      %1375 = dma.vmem_to_hbm [thread:$0]  %s1370, 256, %s9, [#allocation4], 128, 128, 8
    $region61: #{tpu_custom_call.1} parent=1 // pred_fallthru
      _
    // Predicated region
    $region62: #{tpu_custom_call.1} parent=1 // pred_check
      _
    $region63: #{tpu_custom_call.1} parent=1 // pred_check_branch
      %1377 = sbr.rel (0) target = $region65
    $region64: #{tpu_custom_call.1} parent=1 // pred_region
      %1378 = dma.done [#allocation4], 256
    $region65: #{tpu_custom_call.1} parent=1 // pred_fallthru
      _
    %1379 = vsyncpa [#allocation3], 1
    %1380 = vsyncpa [#allocation6], 1
    %1381 = vsyncpa [#allocation9], 1
    %1382 = vsyncpa [#allocation4], 1

</llo_original>
